<compile_context>
chip_gen: v6e
topology: v6e:2x2x1
jax: 0.10.0
libtpu: 0.0.40
codegen_flags: <defaults>
</compile_context>

<pallas_src>
import functools

import jax
import jax.numpy as jnp
from jax import lax
from jax.experimental import pallas as pl
from jax.experimental.pallas import tpu as pltpu


def _round_up(x, m):
    return (x + m - 1) // m * m


def softmax_ce_kernel(xT_ref, keep_ref, w_ref, tgt_ref, loss_ref, acc_ref, *,
                      num_classes, inv_keep):
    # Dropout: zero dropped features (mask is exact 0/1 in bf16); the 1/(1-p)
    # rescale is folded into the f32 logits after the matmul.
    x = xT_ref[...] * keep_ref[...]                            # bf16 (F_pad, TB)

    # logits^T = W @ x^T on the MXU: bf16 operands, f32 accumulation.
    logits = jnp.dot(w_ref[...], x,
                     preferred_element_type=jnp.float32)       # f32 (C_pad, TB)
    if inv_keep != 1.0:
        logits = logits * jnp.float32(inv_keep)

    c_pad, tb = logits.shape
    cls = lax.broadcasted_iota(jnp.int32, (c_pad, tb), 0)      # class id / row
    if num_classes < c_pad:
        logits = jnp.where(cls < num_classes, logits, -jnp.inf)

    # Cross-entropy (reduction='none'), numerically stable log-sum-exp.
    m = jnp.max(logits, axis=0, keepdims=True)                 # (1, TB)
    z = logits - m
    lse = jnp.log(jnp.sum(jnp.exp(z), axis=0, keepdims=True))  # (1, TB)

    tgt = tgt_ref[...]                                         # (1, TB) int32
    onehot = cls == tgt
    picked = jnp.sum(jnp.where(onehot, z, 0.0), axis=0, keepdims=True)
    loss_ref[...] = lse - picked                               # (1, TB)

    # Accuracy with torch.max tie semantics (first max index), reusing m.
    is_max = logits == m
    preds = jnp.min(jnp.where(is_max, cls, c_pad), axis=0, keepdims=True)
    acc_ref[...] = (preds == tgt).astype(jnp.float32)


def softmax_ce_loss(feature, target, weight, *, dropout=0.5, rng_key=None,
                    keep_mask=None, tile_b_cap=512,
                    vmem_tile_budget=16 * 1024 * 1024):
    """Pallas equivalent of SoftmaxCELoss.forward (training-mode dropout).

    feature: (B, F) float, target: (B,) int, weight: (C, F) float.
    Returns (loss, acc), each shape (B,) float32.
    """
    B, F = feature.shape
    C = weight.shape[0]

    F_pad = _round_up(F, 128)
    C_pad = _round_up(C, 128)

    # Batch tile mapped to lanes; sized so the double-buffered (x^T + keep)
    # tiles fit the streaming budget while W stays resident -> safe even on
    # v7x's 64 MiB VMEM, and as large as possible on v5e/v6e.
    per_col_bytes = 2 * 2 * F_pad * 2            # 2 arrays * 2 buffers * bf16
    tb = max(128, min(tile_b_cap,
                      (vmem_tile_budget // per_col_bytes) // 128 * 128))
    TB = min(tb, _round_up(B, 128))
    B_pad = _round_up(B, TB)
    grid = (B_pad // TB,)

    xT = jnp.zeros((F_pad, B_pad), jnp.bfloat16).at[:F, :B].set(
        jnp.asarray(feature, jnp.bfloat16).T)
    w = jnp.zeros((C_pad, F_pad), jnp.bfloat16).at[:C, :F].set(
        jnp.asarray(weight, jnp.bfloat16))
    tgt = jnp.zeros((1, B_pad), jnp.int32).at[0, :B].set(
        jnp.asarray(target, jnp.int32))

    # TODO(synk): dropout keep-mask is drawn host-side with jax.random because
    # pltpu.prng_* has no CPU/interpret lowering; statistics match torch's
    # nn.Dropout (training mode) but the RNG stream does not bit-match torch.
    if dropout > 0:
        if keep_mask is None:
            if rng_key is None:
                rng_key = jax.random.PRNGKey(0)
            keep_mask = jax.random.bernoulli(rng_key, 1.0 - dropout, (B, F))
        keepT = jnp.zeros((F_pad, B_pad), jnp.bfloat16).at[:F, :B].set(
            jnp.asarray(keep_mask, jnp.bfloat16).T)
        inv_keep = 1.0 / (1.0 - float(dropout))
    else:
        keepT = jnp.ones((F_pad, B_pad), jnp.bfloat16)
        inv_keep = 1.0

    kernel = functools.partial(softmax_ce_kernel,
                               num_classes=C, inv_keep=inv_keep)

    loss, acc = pl.pallas_call(
        kernel,
        grid=grid,
        in_specs=[
            pl.BlockSpec((F_pad, TB), lambda i: (0, i)),       # x^T tile
            pl.BlockSpec((F_pad, TB), lambda i: (0, i)),       # keep-mask tile
            pl.BlockSpec((C_pad, F_pad), lambda i: (0, 0)),    # W (resident)
            pl.BlockSpec((1, TB), lambda i: (0, i)),           # targets
        ],
        out_specs=(
            pl.BlockSpec((1, TB), lambda i: (0, i)),           # loss (lane-dense)
            pl.BlockSpec((1, TB), lambda i: (0, i)),           # acc  (lane-dense)
        ),
        out_shape=(
            jax.ShapeDtypeStruct((1, B_pad), jnp.float32),
            jax.ShapeDtypeStruct((1, B_pad), jnp.float32),
        ),
        compiler_params=pltpu.CompilerParams(
            dimension_semantics=("parallel",),      # shard batch tiles over TCs
            vmem_limit_bytes=48 * 1024 * 1024),     # headroom under v7x 64 MiB
    )(xT, keepT, w, tgt)

    return loss[0, :B], acc[0, :B]


if __name__ == "__main__":
    B, num_features, num_classes = 8, 32, 16
    dropout = 0.5

    key = jax.random.PRNGKey(0)
    k_feat, k_w, k_tgt, k_drop = jax.random.split(key, 4)

    feature = jax.random.normal(k_feat, (B, num_features), dtype=jnp.float32)
    # nn.Linear.reset_parameters (bias-free): uniform(-1/sqrt(F), 1/sqrt(F))
    bound = 1.0 / (num_features ** 0.5)
    weight = jax.random.uniform(k_w, (num_classes, num_features),
                                minval=-bound, maxval=bound, dtype=jnp.float32)
    target = jax.random.randint(k_tgt, (B,), 0, num_classes, dtype=jnp.int32)
    keep = jax.random.bernoulli(k_drop, 1.0 - dropout, (B, num_features))

    loss, acc = softmax_ce_loss(feature, target, weight,
                                dropout=dropout, keep_mask=keep)
    jax.block_until_ready((loss, acc))

    # Pure-JAX reference at the same (bf16-operand, f32-accum) precision.
    x_ref = feature.astype(jnp.bfloat16) * keep.astype(jnp.bfloat16)
    logits_ref = jnp.dot(x_ref, weight.astype(jnp.bfloat16).T,
                         preferred_element_type=jnp.float32) / (1.0 - dropout)
    ref_loss = (jax.nn.logsumexp(logits_ref, axis=1)
                - jnp.take_along_axis(logits_ref, target[:, None], axis=1)[:, 0])

    assert loss.shape == (B,) and acc.shape == (B,)
    assert bool(jnp.all(jnp.isfinite(loss)))
    assert bool(jnp.all((acc == 0.0) | (acc == 1.0)))
    assert bool(jnp.allclose(loss, ref_loss, rtol=5e-2, atol=5e-2))
    print("KERNEL_OK")
</pallas_src>

<mosaic_0001>
module attributes {stable_mosaic.version = 11 : i64} {
  func.func @softmax_ce_kernel(%arg0: i32, %arg1: memref<128x128xbf16, #tpu.memory_space<vmem>>, %arg2: memref<128x128xbf16, #tpu.memory_space<vmem>>, %arg3: memref<128x128xbf16, #tpu.memory_space<vmem>>, %arg4: memref<1x128xi32, #tpu.memory_space<vmem>>, %arg5: memref<1x128xf32, #tpu.memory_space<vmem>>, %arg6: memref<1x128xf32, #tpu.memory_space<vmem>>) attributes {dimension_semantics = [#tpu.dimension_semantics<parallel>], iteration_bounds = array<i64: 1>, scalar_prefetch = 0 : i64, scratch_operands = 0 : i64, tpu.core_type = #tpu.core_type<tc>, window_params = [{transform_indices = @transform_0, window_bounds = array<i64: 128, 128>}, {transform_indices = @transform_1, window_bounds = array<i64: 128, 128>}, {pipeline_mode = #tpu.pipeline_mode<synchronous>, transform_indices = @transform_2, window_bounds = array<i64: 128, 128>}, {transform_indices = @transform_3, window_bounds = array<i64: 1, 128>}, {transform_indices = @transform_4, window_bounds = array<i64: 1, 128>}, {transform_indices = @transform_5, window_bounds = array<i64: 1, 128>}]} {
    %c0 = arith.constant 0 : index
    %c0_0 = arith.constant 0 : index
    %0 = vector.load %arg1[%c0, %c0_0] : memref<128x128xbf16, #tpu.memory_space<vmem>>, vector<128x128xbf16>
    %c0_1 = arith.constant 0 : index
    %c0_2 = arith.constant 0 : index
    %1 = vector.load %arg2[%c0_1, %c0_2] : memref<128x128xbf16, #tpu.memory_space<vmem>>, vector<128x128xbf16>
    %2 = arith.mulf %0, %1 : vector<128x128xbf16>
    %c0_3 = arith.constant 0 : index
    %c0_4 = arith.constant 0 : index
    %3 = vector.load %arg3[%c0_3, %c0_4] : memref<128x128xbf16, #tpu.memory_space<vmem>>, vector<128x128xbf16>
    %cst = arith.constant dense<0.000000e+00> : vector<128x128xf32>
    %4 = tpu.matmul %3, %2, %cst {dimension_numbers = #tpu.dot_dimension_numbers<[1], [0], [0], [1], [0, 0, 1, 1], [], []>} : vector<128x128xbf16>, vector<128x128xbf16>, vector<128x128xf32> -> vector<128x128xf32>
    %cst_5 = arith.constant 2.000000e+00 : f32
    %5 = vector.broadcast %cst_5 : f32 to vector<128x128xf32>
    %6 = arith.mulf %4, %5 : vector<128x128xf32>
    %7 = tpu.iota {dimensions = array<i32: 0>} : vector<128x128xi32>
    %c16_i32 = arith.constant 16 : i32
    %8 = vector.broadcast %c16_i32 : i32 to vector<128x128xi32>
    %9 = arith.cmpi slt, %7, %8 : vector<128x128xi32>
    %cst_6 = arith.constant 0xFF800000 : f32
    %10 = vector.broadcast %cst_6 : f32 to vector<128x128xf32>
    %11 = arith.select %9, %6, %10 : vector<128x128xi1>, vector<128x128xf32>
    %cst_7 = arith.constant dense<0xFF800000> : vector<128xf32>
    %12 = vector.multi_reduction <maximumf>, %11, %cst_7 [0] : vector<128x128xf32> to vector<128xf32>
    %13 = vector.shape_cast %12 : vector<128xf32> to vector<1x128xf32>
    %14 = vector.broadcast %13 : vector<1x128xf32> to vector<128x128xf32>
    %15 = arith.subf %11, %14 : vector<128x128xf32>
    %16 = math.exp %15 : vector<128x128xf32>
    %cst_8 = arith.constant dense<0.000000e+00> : vector<128xf32>
    %17 = vector.multi_reduction <add>, %16, %cst_8 [0] : vector<128x128xf32> to vector<128xf32>
    %18 = vector.shape_cast %17 : vector<128xf32> to vector<1x128xf32>
    %19 = math.log %18 : vector<1x128xf32>
    %c0_9 = arith.constant 0 : index
    %c0_10 = arith.constant 0 : index
    %20 = vector.load %arg4[%c0_9, %c0_10] : memref<1x128xi32, #tpu.memory_space<vmem>>, vector<1x128xi32>
    %21 = vector.broadcast %20 : vector<1x128xi32> to vector<128x128xi32>
    %22 = arith.cmpi eq, %7, %21 : vector<128x128xi32>
    %cst_11 = arith.constant 0.000000e+00 : f32
    %23 = vector.broadcast %cst_11 : f32 to vector<128x128xf32>
    %24 = arith.select %22, %15, %23 : vector<128x128xi1>, vector<128x128xf32>
    %cst_12 = arith.constant dense<0.000000e+00> : vector<128xf32>
    %25 = vector.multi_reduction <add>, %24, %cst_12 [0] : vector<128x128xf32> to vector<128xf32>
    %26 = vector.shape_cast %25 : vector<128xf32> to vector<1x128xf32>
    %27 = arith.subf %19, %26 : vector<1x128xf32>
    %c0_13 = arith.constant 0 : index
    %c0_14 = arith.constant 0 : index
    %28 = vector.load %arg5[%c0_13, %c0_14] : memref<1x128xf32, #tpu.memory_space<vmem>>, vector<1x128xf32>
    tpu.vector_store %arg5[%c0_13, %c0_14], %27 {strides = array<i32>} : memref<1x128xf32, #tpu.memory_space<vmem>>, vector<1x128xf32>,
    %29 = vector.broadcast %13 : vector<1x128xf32> to vector<128x128xf32>
    %30 = arith.cmpf oeq, %11, %29 : vector<128x128xf32>
    %c128_i32 = arith.constant 128 : i32
    %31 = vector.broadcast %c128_i32 : i32 to vector<128x128xi32>
    %32 = arith.select %30, %7, %31 : vector<128x128xi1>, vector<128x128xi32>
    %cst_15 = arith.constant dense<2147483647> : vector<128xi32>
    %33 = vector.multi_reduction <minsi>, %32, %cst_15 [0] : vector<128x128xi32> to vector<128xi32>
    %34 = vector.shape_cast %33 : vector<128xi32> to vector<1x128xi32>
    %35 = arith.cmpi eq, %34, %20 : vector<1x128xi32>
    %36 = arith.extui %35 : vector<1x128xi1> to vector<1x128xi32>
    %37 = arith.sitofp %36 : vector<1x128xi32> to vector<1x128xf32>
    %c0_16 = arith.constant 0 : index
    %c0_17 = arith.constant 0 : index
    %38 = vector.load %arg6[%c0_16, %c0_17] : memref<1x128xf32, #tpu.memory_space<vmem>>, vector<1x128xf32>
    tpu.vector_store %arg6[%c0_16, %c0_17], %37 {strides = array<i32>} : memref<1x128xf32, #tpu.memory_space<vmem>>, vector<1x128xf32>,
    return
  }
  func.func @transform_0(%arg0: i32) -> (i32, i32) {
    %c0_i32 = arith.constant 0 : i32
    %c0_i32_0 = arith.constant 0 : i32
    return %c0_i32, %arg0 : i32, i32
  }
  func.func @transform_1(%arg0: i32) -> (i32, i32) {
    %c0_i32 = arith.constant 0 : i32
    %c0_i32_0 = arith.constant 0 : i32
    return %c0_i32, %arg0 : i32, i32
  }
  func.func @transform_2(%arg0: i32) -> (i32, i32) {
    %c0_i32 = arith.constant 0 : i32
    %c0_i32_0 = arith.constant 0 : i32
    %c0_i32_1 = arith.constant 0 : i32
    return %c0_i32, %c0_i32_0 : i32, i32
  }
  func.func @transform_3(%arg0: i32) -> (i32, i32) {
    %c0_i32 = arith.constant 0 : i32
    %c0_i32_0 = arith.constant 0 : i32
    return %c0_i32, %arg0 : i32, i32
  }
  func.func @transform_4(%arg0: i32) -> (i32, i32) {
    %c0_i32 = arith.constant 0 : i32
    %c0_i32_0 = arith.constant 0 : i32
    return %c0_i32, %arg0 : i32, i32
  }
  func.func @transform_5(%arg0: i32) -> (i32, i32) {
    %c0_i32 = arith.constant 0 : i32
    %c0_i32_0 = arith.constant 0 : i32
    return %c0_i32, %arg0 : i32, i32
  }
}

</mosaic_0001>

<llo_original>
// kernel: tpu_custom_call.1
$region0: #{tpu_custom_call.1}
  #allocation0 [shape = 'u32[]', space=smem, size = 0x4, offset = 0x4, fixed_abs, tag = 'smem constant byte address 0x4 - core index']
  #allocation1 [shape = 'u32[144,128]{1,0:T(1,128)}', space=vmem, size = 0x12000, scoped, tag = 'internal scratch']
  %s0 = inlined_call_operand.hbm [shape: bf16[128,128], index: 0, kind: input, shape index: {}]
  %s1 = inlined_call_operand.hbm [shape: bf16[128,128], index: 1, kind: input, shape index: {}]
  %s2 = inlined_call_operand.hbm [shape: bf16[128,128], index: 2, kind: input, shape index: {}]
  %s3 = inlined_call_operand.vmem [shape: s32[1,128], index: 3, kind: input, shape index: {}]
  %s4 = inlined_call_operand.hbm [shape: f32[1,128], index: 4, kind: output, shape index: {0}]
  %s5 = inlined_call_operand.hbm [shape: f32[1,128], index: 5, kind: output, shape index: {1}]
  %6 = xla_tuple %s4, %s5
  %s7 = sld [smem:[#allocation0]]
  $region46: #{tpu_custom_call.1} parent=0
    _
  %s9 = ssub.s32 1, %s7
  %s10 = scalar_select 0, %s9, %s7
  $region1: #{tpu_custom_call.1} parent=0
    #allocation2 [shape = 'u8[32768]{0}', space=vmem, size = 0x8000, scoped, tag = 'input window, operand 0, single buffered']
    #allocation3 [shape = 's32[1]{0}', space=sflag, size = 0x4, scoped, tag = 'scoped memory for tpu_custom_call.1']
    #allocation4 [shape = 's32[1]{0}', space=sflag, size = 0x4, scoped, tag = 'scoped memory for tpu_custom_call.1']
    #allocation5 [shape = 'u8[32768]{0}', space=vmem, size = 0x8000, scoped, tag = 'input window, operand 1, single buffered']
    #allocation6 [shape = 's32[1]{0}', space=sflag, size = 0x4, scoped, tag = 'scoped memory for tpu_custom_call.1']
    #allocation7 [shape = 'u8[32768]{0}', space=vmem, size = 0x8000, scoped, tag = 'input window, operand 2, single buffered']
    #allocation8 [shape = 'u8[512]{0}', space=vmem, size = 0x400, scoped, tag = 'output window, operand 0, single buffered']
    #allocation9 [shape = 'u8[512]{0}', space=vmem, size = 0x400, scoped, tag = 'output window, operand 1, single buffered']
    #allocation10 [shape = 's32[1]{0}', space=sflag, size = 0x4, scoped, tag = 'scoped memory for tpu_custom_call.1']
    %11 = vsyncpa [#allocation3], 0
    %12 = vsyncpa [#allocation6], 0
    %13 = vsyncpa [#allocation4], 0
    %14 = vsyncpa [#allocation10], 0
    // Predicated region
    $region2: #{tpu_custom_call.1} parent=1 // pred_check
      _
    $region3: #{tpu_custom_call.1} parent=1 // pred_check_branch
      %16 = sbr.rel (0) target = $region5
    $region4: #{tpu_custom_call.1} parent=1 // pred_region
      %s18 = ssub.s32 1024, 1024
      %19 = vsyncadd [#allocation3], %s18
      %s20 = sshll.u32 [#allocation2], 4
      %s21 = int_to_ptr.vmem [resolvable:$true] %s20
      %26 = dma.hbm_to_vmem [thread:$0]  %s0, 1024, %s21, [#allocation3], 64, 64, 4
    $region5: #{tpu_custom_call.1} parent=1 // pred_fallthru
      _
    // Predicated region
    $region6: #{tpu_custom_call.1} parent=1 // pred_check
      _
    $region7: #{tpu_custom_call.1} parent=1 // pred_check_branch
      %28 = sbr.rel (0) target = $region9
    $region8: #{tpu_custom_call.1} parent=1 // pred_region
      %s30 = ssub.s32 1024, 1024
      %31 = vsyncadd [#allocation6], %s30
      %s32 = sshll.u32 [#allocation5], 4
      %s33 = int_to_ptr.vmem [resolvable:$true] %s32
      %38 = dma.hbm_to_vmem [thread:$0]  %s1, 1024, %s33, [#allocation6], 64, 64, 4
    $region9: #{tpu_custom_call.1} parent=1 // pred_fallthru
      _
    // Predicated region
    $region10: #{tpu_custom_call.1} parent=1 // pred_check
      _
    $region11: #{tpu_custom_call.1} parent=1 // pred_check_branch
      %40 = sbr.rel (0) target = $region13
    $region12: #{tpu_custom_call.1} parent=1 // pred_region
      %s42 = ssub.s32 1024, 1024
      %43 = vsyncadd [#allocation6], %s42
      %s44 = sshll.u32 [#allocation7], 4
      %s45 = int_to_ptr.vmem [resolvable:$true] %s44
      %50 = dma.hbm_to_vmem [thread:$0]  %s2, 1024, %s45, [#allocation6], 64, 64, 4
    $region13: #{tpu_custom_call.1} parent=1 // pred_fallthru
      _
    // Predicated region
    $region14: #{tpu_custom_call.1} parent=1 // pred_check
      _
    $region15: #{tpu_custom_call.1} parent=1 // pred_check_branch
      %52 = sbr.rel (0) target = $region17
    $region16: #{tpu_custom_call.1} parent=1 // pred_region
      _
    $region17: #{tpu_custom_call.1} parent=1 // pred_fallthru
      _
    // Predicated region
    $region18: #{tpu_custom_call.1} parent=1 // pred_check
      _
    $region19: #{tpu_custom_call.1} parent=1 // pred_check_branch
      %54 = sbr.rel (0) target = $region21
    $region20: #{tpu_custom_call.1} parent=1 // pred_region
      %55 = dma.done [#allocation3], 1024
    $region21: #{tpu_custom_call.1} parent=1 // pred_fallthru
      _
    // Predicated region
    $region22: #{tpu_custom_call.1} parent=1 // pred_check
      _
    $region23: #{tpu_custom_call.1} parent=1 // pred_check_branch
      %57 = sbr.rel (0) target = $region25
    $region24: #{tpu_custom_call.1} parent=1 // pred_region
      %58 = dma.done [#allocation6], 1024
    $region25: #{tpu_custom_call.1} parent=1 // pred_fallthru
      _
    // Predicated region
    $region26: #{tpu_custom_call.1} parent=1 // pred_check
      _
    $region27: #{tpu_custom_call.1} parent=1 // pred_check_branch
      %60 = sbr.rel (0) target = $region29
    $region28: #{tpu_custom_call.1} parent=1 // pred_region
      %61 = dma.done [#allocation6], 1024
    $region29: #{tpu_custom_call.1} parent=1 // pred_fallthru
      _
    %v63 = vld [vmem:[#allocation2] sm:$0xf]
    %v64 = vld [vmem:[#allocation2 + $0x4] sm:$0xf]
    %v65 = vld [vmem:[#allocation2 + $0x8] sm:$0xf]
    %v66 = vld [vmem:[#allocation2 + $0xc] sm:$0xf]
    %v67 = vld [vmem:[#allocation2 + $0x10] sm:$0xf]
    %v68 = vld [vmem:[#allocation2 + $0x14] sm:$0xf]
    %v69 = vld [vmem:[#allocation2 + $0x18] sm:$0xf]
    %v70 = vld [vmem:[#allocation2 + $0x1c] sm:$0xf]
    %v71 = vld [vmem:[#allocation2 + $0x20] sm:$0xf]
    %v72 = vld [vmem:[#allocation2 + $0x24] sm:$0xf]
    %v73 = vld [vmem:[#allocation2 + $0x28] sm:$0xf]
    %v74 = vld [vmem:[#allocation2 + $0x2c] sm:$0xf]
    %v75 = vld [vmem:[#allocation2 + $0x30] sm:$0xf]
    %v76 = vld [vmem:[#allocation2 + $0x34] sm:$0xf]
    %v77 = vld [vmem:[#allocation2 + $0x38] sm:$0xf]
    %v78 = vld [vmem:[#allocation2 + $0x3c] sm:$0xf]
    %v79 = vld [vmem:[#allocation5] sm:$0xf]
    %v80 = vld [vmem:[#allocation5 + $0x4] sm:$0xf]
    %v81 = vld [vmem:[#allocation5 + $0x8] sm:$0xf]
    %v82 = vld [vmem:[#allocation5 + $0xc] sm:$0xf]
    %v83 = vld [vmem:[#allocation5 + $0x10] sm:$0xf]
    %v84 = vld [vmem:[#allocation5 + $0x14] sm:$0xf]
    %v85 = vld [vmem:[#allocation5 + $0x18] sm:$0xf]
    %v86 = vld [vmem:[#allocation5 + $0x1c] sm:$0xf]
    %v87 = vld [vmem:[#allocation5 + $0x20] sm:$0xf]
    %v88 = vld [vmem:[#allocation5 + $0x24] sm:$0xf]
    %v89 = vld [vmem:[#allocation5 + $0x28] sm:$0xf]
    %v90 = vld [vmem:[#allocation5 + $0x2c] sm:$0xf]
    %v91 = vld [vmem:[#allocation5 + $0x30] sm:$0xf]
    %v92 = vld [vmem:[#allocation5 + $0x34] sm:$0xf]
    %v93 = vld [vmem:[#allocation5 + $0x38] sm:$0xf]
    %v94 = vld [vmem:[#allocation5 + $0x3c] sm:$0xf]
    %v95 = vmul.bf16 %v63, %v79
    %v96 = vmul.bf16 %v64, %v80
    %v97 = vmul.bf16 %v65, %v81
    %v98 = vmul.bf16 %v66, %v82
    %v99 = vmul.bf16 %v67, %v83
    %v100 = vmul.bf16 %v68, %v84
    %v101 = vmul.bf16 %v69, %v85
    %v102 = vmul.bf16 %v70, %v86
    %v103 = vmul.bf16 %v71, %v87
    %v104 = vmul.bf16 %v72, %v88
    %v105 = vmul.bf16 %v73, %v89
    %v106 = vmul.bf16 %v74, %v90
    %v107 = vmul.bf16 %v75, %v91
    %v108 = vmul.bf16 %v76, %v92
    %v109 = vmul.bf16 %v77, %v93
    %v110 = vmul.bf16 %v78, %v94
    %v111 = vld [vmem:[#allocation7] sm:$0xf]
    %v112 = vld [vmem:[#allocation7 + $0x4] sm:$0xf]
    %v113 = vld [vmem:[#allocation7 + $0x8] sm:$0xf]
    %v114 = vld [vmem:[#allocation7 + $0xc] sm:$0xf]
    %v115 = vld [vmem:[#allocation7 + $0x10] sm:$0xf]
    %v116 = vld [vmem:[#allocation7 + $0x14] sm:$0xf]
    %v117 = vld [vmem:[#allocation7 + $0x18] sm:$0xf]
    %v118 = vld [vmem:[#allocation7 + $0x1c] sm:$0xf]
    %v119 = vld [vmem:[#allocation7 + $0x20] sm:$0xf]
    %v120 = vld [vmem:[#allocation7 + $0x24] sm:$0xf]
    %v121 = vld [vmem:[#allocation7 + $0x28] sm:$0xf]
    %v122 = vld [vmem:[#allocation7 + $0x2c] sm:$0xf]
    %v123 = vld [vmem:[#allocation7 + $0x30] sm:$0xf]
    %v124 = vld [vmem:[#allocation7 + $0x34] sm:$0xf]
    %v125 = vld [vmem:[#allocation7 + $0x38] sm:$0xf]
    %v126 = vld [vmem:[#allocation7 + $0x3c] sm:$0xf]
    %v143 = vunpack.c.l.b16 %v111
    %v144 = vunpack.c.l.b16 %v112
    %v145 = vunpack.c.l.b16 %v113
    %v146 = vunpack.c.l.b16 %v114
    %v147 = vunpack.c.l.b16 %v115
    %v148 = vunpack.c.l.b16 %v116
    %v149 = vunpack.c.l.b16 %v117
    %v150 = vunpack.c.l.b16 %v118
    %v151 = vunpack.c.l.b16 %v119
    %v152 = vunpack.c.l.b16 %v120
    %v153 = vunpack.c.l.b16 %v121
    %v154 = vunpack.c.l.b16 %v122
    %v155 = vunpack.c.l.b16 %v123
    %v156 = vunpack.c.l.b16 %v124
    %v157 = vunpack.c.l.b16 %v125
    %v158 = vunpack.c.l.b16 %v126
    %v159 = vpack.c.b16 %v144, %v143
    %v160 = vpack.c.b16 %v146, %v145
    %v161 = vpack.c.b16 %v148, %v147
    %v162 = vpack.c.b16 %v150, %v149
    %v163 = vpack.c.b16 %v152, %v151
    %v164 = vpack.c.b16 %v154, %v153
    %v165 = vpack.c.b16 %v156, %v155
    %v166 = vpack.c.b16 %v158, %v157
    %v191 = vunpack.c.l.b16 %v95
    %v192 = vunpack.c.l.b16 %v96
    %v193 = vunpack.c.l.b16 %v97
    %v194 = vunpack.c.l.b16 %v98
    %v195 = vunpack.c.l.b16 %v99
    %v196 = vunpack.c.l.b16 %v100
    %v197 = vunpack.c.l.b16 %v101
    %v198 = vunpack.c.l.b16 %v102
    %v199 = vunpack.c.l.b16 %v103
    %v200 = vunpack.c.l.b16 %v104
    %v201 = vunpack.c.l.b16 %v105
    %v202 = vunpack.c.l.b16 %v106
    %v203 = vunpack.c.l.b16 %v107
    %v204 = vunpack.c.l.b16 %v108
    %v205 = vunpack.c.l.b16 %v109
    %v206 = vunpack.c.l.b16 %v110
    %v207 = vpack.c.b16 %v192, %v191
    %v208 = vpack.c.b16 %v194, %v193
    %v209 = vpack.c.b16 %v196, %v195
    %v210 = vpack.c.b16 %v198, %v197
    %v211 = vpack.c.b16 %v200, %v199
    %v212 = vpack.c.b16 %v202, %v201
    %v213 = vpack.c.b16 %v204, %v203
    %v214 = vpack.c.b16 %v206, %v205
    %223 = vmatprep.subr.bf16.mxu0 0
    %224 = vmatpush1.bf16.msra.mxu0 %v214
    %225 = vmatprep.subr.bf16.mxu0 0
    %226 = vmatpush1.bf16.msra.mxu0 %v213
    %227 = vmatprep.subr.bf16.mxu0 0
    %228 = vmatpush1.bf16.msra.mxu0 %v212
    %229 = vmatprep.subr.bf16.mxu0 0
    %230 = vmatpush1.bf16.msra.mxu0 %v211
    %231 = vmatprep.subr.bf16.mxu0 0
    %232 = vmatpush1.bf16.msra.mxu0 %v210
    %233 = vmatprep.subr.bf16.mxu0 0
    %234 = vmatpush1.bf16.msra.mxu0 %v209
    %235 = vmatprep.subr.bf16.mxu0 0
    %236 = vmatpush1.bf16.msra.mxu0 %v208
    %237 = vmatprep.subr.bf16.mxu0 0
    %238 = vmatpush1.bf16.msra.mxu0 %v207
    %239 = vmatprep.subr.bf16.mxu0 0
    %240 = vmatpush2.bf16.msra.mxu0 0
    %241 = vmatprep.subr.bf16.mxu0 0
    %242 = vmatpush2.bf16.msra.mxu0 0
    %243 = vmatprep.subr.bf16.mxu0 0
    %244 = vmatpush2.bf16.msra.mxu0 0
    %245 = vmatprep.subr.bf16.mxu0 0
    %246 = vmatpush2.bf16.msra.mxu0 0
    %247 = vmatprep.subr.bf16.mxu0 0
    %248 = vmatpush2.bf16.msra.mxu0 0
    %249 = vmatprep.subr.bf16.mxu0 0
    %250 = vmatpush2.bf16.msra.mxu0 0
    %251 = vmatprep.subr.bf16.mxu0 0
    %252 = vmatpush2.bf16.msra.mxu0 0
    %253 = vmatprep.subr.bf16.mxu0 0
    %254 = vmatpush2.bf16.msra.mxu0 0
    %255 = vmatprep.mubr.bf16.mxu0 0
    %256 = vmatmul.mubr.bf16.gmra.mxu0 %v159
    %v257 = vpop.f32.mrf.mxu0
    %v258 = vadd.f32 0.0, %v257
    %v259 = vpop.f32.mrf.mxu0
    %v260 = vpop.f32.mrf.mxu0
    %v261 = vadd.f32 0.0, %v260
    %v262 = vpop.f32.mrf.mxu0
    %263 = vmatprep.mubr.bf16.mxu0 0
    %264 = vmatmul.mubr.bf16.gmra.mxu0 %v160
    %v265 = vpop.f32.mrf.mxu0
    %v266 = vadd.f32 0.0, %v265
    %v267 = vpop.f32.mrf.mxu0
    %v268 = vpop.f32.mrf.mxu0
    %v269 = vadd.f32 0.0, %v268
    %v270 = vpop.f32.mrf.mxu0
    %271 = vmatprep.mubr.bf16.mxu0 0
    %272 = vmatmul.mubr.bf16.gmra.mxu0 %v161
    %v273 = vpop.f32.mrf.mxu0
    %v274 = vadd.f32 0.0, %v273
    %v275 = vpop.f32.mrf.mxu0
    %v276 = vpop.f32.mrf.mxu0
    %v277 = vadd.f32 0.0, %v276
    %v278 = vpop.f32.mrf.mxu0
    %279 = vmatprep.mubr.bf16.mxu0 0
    %280 = vmatmul.mubr.bf16.gmra.mxu0 %v162
    %v281 = vpop.f32.mrf.mxu0
    %v282 = vadd.f32 0.0, %v281
    %v283 = vpop.f32.mrf.mxu0
    %v284 = vpop.f32.mrf.mxu0
    %v285 = vadd.f32 0.0, %v284
    %v286 = vpop.f32.mrf.mxu0
    %287 = vmatprep.mubr.bf16.mxu0 0
    %288 = vmatmul.mubr.bf16.gmra.mxu0 %v163
    %v289 = vpop.f32.mrf.mxu0
    %v290 = vadd.f32 0.0, %v289
    %v291 = vpop.f32.mrf.mxu0
    %v292 = vpop.f32.mrf.mxu0
    %v293 = vadd.f32 0.0, %v292
    %v294 = vpop.f32.mrf.mxu0
    %295 = vmatprep.mubr.bf16.mxu0 0
    %296 = vmatmul.mubr.bf16.gmra.mxu0 %v164
    %v297 = vpop.f32.mrf.mxu0
    %v298 = vadd.f32 0.0, %v297
    %v299 = vpop.f32.mrf.mxu0
    %v300 = vpop.f32.mrf.mxu0
    %v301 = vadd.f32 0.0, %v300
    %v302 = vpop.f32.mrf.mxu0
    %303 = vmatprep.mubr.bf16.mxu0 0
    %304 = vmatmul.mubr.bf16.gmra.mxu0 %v165
    %v305 = vpop.f32.mrf.mxu0
    %v306 = vadd.f32 0.0, %v305
    %v307 = vpop.f32.mrf.mxu0
    %v308 = vpop.f32.mrf.mxu0
    %v309 = vadd.f32 0.0, %v308
    %v310 = vpop.f32.mrf.mxu0
    %311 = vmatprep.mubr.bf16.mxu0 0
    %312 = vmatmul.mubr.bf16.gmra.mxu0 %v166
    %v313 = vpop.f32.mrf.mxu0
    %v314 = vadd.f32 0.0, %v313
    %v315 = vpop.f32.mrf.mxu0
    %v316 = vpop.f32.mrf.mxu0
    %v317 = vadd.f32 0.0, %v316
    %v318 = vpop.f32.mrf.mxu0
    %319 = vdwg.mxu0
    %v320 = vmul.f32 %v258, 2.0
    %v321 = vmul.f32 %v261, 2.0
    %v322 = vmul.f32 %v266, 2.0
    %v323 = vmul.f32 %v269, 2.0
    %v324 = vmul.f32 %v274, 2.0
    %v325 = vmul.f32 %v277, 2.0
    %v326 = vmul.f32 %v282, 2.0
    %v327 = vmul.f32 %v285, 2.0
    %v328 = vmul.f32 %v290, 2.0
    %v329 = vmul.f32 %v293, 2.0
    %v330 = vmul.f32 %v298, 2.0
    %v331 = vmul.f32 %v301, 2.0
    %v332 = vmul.f32 %v306, 2.0
    %v333 = vmul.f32 %v309, 2.0
    %v334 = vmul.f32 %v314, 2.0
    %v335 = vmul.f32 %v317, 2.0
    %v336 = vlaneseq
    %v337 = vshrl.u32 %v336, 7
    %v338 = vadd.s32 %v337, 8
    %v339 = vadd.s32 %v337, 16
    %v340 = vadd.s32 %v337, 24
    %v341 = vadd.s32 %v337, 32
    %v342 = vadd.s32 %v337, 40
    %v343 = vadd.s32 %v337, 48
    %v344 = vadd.s32 %v337, 56
    %v345 = vadd.s32 %v337, 64
    %v346 = vadd.s32 %v337, 72
    %v347 = vadd.s32 %v337, 80
    %v348 = vadd.s32 %v337, 88
    %v349 = vadd.s32 %v337, 96
    %v350 = vadd.s32 %v337, 104
    %v351 = vadd.s32 %v337, 112
    %v352 = vadd.s32 %v337, 120
    %vm353 = vcmp.lt.s32.totalorder %v337, 16
    %vm354 = vcmp.lt.s32.totalorder %v338, 16
    %vm355 = vcmp.lt.s32.totalorder %v339, 16
    %vm356 = vcmp.lt.s32.totalorder %v340, 16
    %vm357 = vcmp.lt.s32.totalorder %v341, 16
    %vm358 = vcmp.lt.s32.totalorder %v342, 16
    %vm359 = vcmp.lt.s32.totalorder %v343, 16
    %vm360 = vcmp.lt.s32.totalorder %v344, 16
    %vm361 = vcmp.lt.s32.totalorder %v345, 16
    %vm362 = vcmp.lt.s32.totalorder %v346, 16
    %vm363 = vcmp.lt.s32.totalorder %v347, 16
    %vm364 = vcmp.lt.s32.totalorder %v348, 16
    %vm365 = vcmp.lt.s32.totalorder %v349, 16
    %vm366 = vcmp.lt.s32.totalorder %v350, 16
    %vm367 = vcmp.lt.s32.totalorder %v351, 16
    %vm368 = vcmp.lt.s32.totalorder %v352, 16
    %v369 = vsel %vm353, %v320, -inf
    %v370 = vsel %vm354, %v321, -inf
    %v371 = vsel %vm355, %v322, -inf
    %v372 = vsel %vm356, %v323, -inf
    %v373 = vsel %vm357, %v324, -inf
    %v374 = vsel %vm358, %v325, -inf
    %v375 = vsel %vm359, %v326, -inf
    %v376 = vsel %vm360, %v327, -inf
    %v377 = vsel %vm361, %v328, -inf
    %v378 = vsel %vm362, %v329, -inf
    %v379 = vsel %vm363, %v330, -inf
    %v380 = vsel %vm364, %v331, -inf
    %v381 = vsel %vm365, %v332, -inf
    %v382 = vsel %vm366, %v333, -inf
    %v383 = vsel %vm367, %v334, -inf
    %v384 = vsel %vm368, %v335, -inf
    %v385 = vmax.f32 %v369, %v373
    %v386 = vmax.f32 %v370, %v374
    %v387 = vmax.f32 %v371, %v375
    %v388 = vmax.f32 %v372, %v376
    %v389 = vmax.f32 %v385, %v377
    %v390 = vmax.f32 %v386, %v378
    %v391 = vmax.f32 %v387, %v379
    %v392 = vmax.f32 %v388, %v380
    %v393 = vmax.f32 %v389, %v381
    %v394 = vmax.f32 %v390, %v382
    %v395 = vmax.f32 %v391, %v383
    %v396 = vmax.f32 %v392, %v384
    %v397 = vmax.f32 %v393, %v394
    %v398 = vmax.f32 %v395, %v396
    %v399 = vmax.f32 %v397, %v398
    %v400 = vrot.slane %v399, 4
    %v401 = vmax.f32 %v399, %v400
    %v402 = vrot.slane %v401, 2
    %v403 = vmax.f32 %v401, %v402
    %v404 = vrot.slane %v403, 1
    %v405 = vmax.f32 %v403, %v404
    %v406 = vsub.f32 %v369, %v405
    %v407 = vsub.f32 %v370, %v405
    %v408 = vsub.f32 %v371, %v405
    %v409 = vsub.f32 %v372, %v405
    %v410 = vsub.f32 %v373, %v405
    %v411 = vsub.f32 %v374, %v405
    %v412 = vsub.f32 %v375, %v405
    %v413 = vsub.f32 %v376, %v405
    %v414 = vsub.f32 %v377, %v405
    %v415 = vsub.f32 %v378, %v405
    %v416 = vsub.f32 %v379, %v405
    %v417 = vsub.f32 %v380, %v405
    %v418 = vsub.f32 %v381, %v405
    %v419 = vsub.f32 %v382, %v405
    %v420 = vsub.f32 %v383, %v405
    %v421 = vsub.f32 %v384, %v405
    %v422 = vmul.f32 %v406, 1.442695
    %v423 = vpow.pop %v422
    %v424 = vmul.f32 %v407, 1.442695
    %v425 = vpow.pop %v424
    %v426 = vmul.f32 %v408, 1.442695
    %v427 = vpow.pop %v426
    %v428 = vmul.f32 %v409, 1.442695
    %v429 = vpow.pop %v428
    %v430 = vmul.f32 %v410, 1.442695
    %v431 = vpow.pop %v430
    %v432 = vmul.f32 %v411, 1.442695
    %v433 = vpow.pop %v432
    %v434 = vmul.f32 %v412, 1.442695
    %v435 = vpow.pop %v434
    %v436 = vmul.f32 %v413, 1.442695
    %v437 = vpow.pop %v436
    %v438 = vmul.f32 %v414, 1.442695
    %v439 = vpow.pop %v438
    %v440 = vmul.f32 %v415, 1.442695
    %v441 = vpow.pop %v440
    %v442 = vmul.f32 %v416, 1.442695
    %v443 = vpow.pop %v442
    %v444 = vmul.f32 %v417, 1.442695
    %v445 = vpow.pop %v444
    %v446 = vmul.f32 %v418, 1.442695
    %v447 = vpow.pop %v446
    %v448 = vmul.f32 %v419, 1.442695
    %v449 = vpow.pop %v448
    %v450 = vmul.f32 %v420, 1.442695
    %v451 = vpow.pop %v450
    %v452 = vmul.f32 %v421, 1.442695
    %v453 = vpow.pop %v452
    %v454 = vadd.f32 %v423, %v425
    %v455 = vadd.f32 %v454, %v427
    %v456 = vadd.f32 %v455, %v429
    %v457 = vadd.f32 %v456, %v431
    %v458 = vadd.f32 %v457, %v433
    %v459 = vadd.f32 %v458, %v435
    %v460 = vadd.f32 %v459, %v437
    %v461 = vadd.f32 %v460, %v439
    %v462 = vadd.f32 %v461, %v441
    %v463 = vadd.f32 %v462, %v443
    %v464 = vadd.f32 %v463, %v445
    %v465 = vadd.f32 %v464, %v447
    %v466 = vadd.f32 %v465, %v449
    %v467 = vadd.f32 %v466, %v451
    %v468 = vadd.f32 %v467, %v453
    %v469 = vrot.slane %v468, 4
    %v470 = vadd.f32 %v468, %v469
    %v471 = vrot.slane %v470, 2
    %v472 = vadd.f32 %v470, %v471
    %v473 = vrot.slane %v472, 1
    %v474 = vadd.f32 %v472, %v473
    %v475 = vlog2.pop %v474
    %v476 = vmul.f32 %v475, 0.6931472
    %v477 = vld [vmem:[%s3] sm:$0x1]
    %v478 = vlaneseq
    %v479 = vshrl.u32 %v478, 7
    %v480 = vsub.s32 0, %v479
    %v481 = vrot.slane %v477, %v480
    %vm482 = vcmp.eq.s32.totalorder %v337, %v481
    %vm483 = vcmp.eq.s32.totalorder %v338, %v481
    %vm484 = vcmp.eq.s32.totalorder %v339, %v481
    %vm485 = vcmp.eq.s32.totalorder %v340, %v481
    %vm486 = vcmp.eq.s32.totalorder %v341, %v481
    %vm487 = vcmp.eq.s32.totalorder %v342, %v481
    %vm488 = vcmp.eq.s32.totalorder %v343, %v481
    %vm489 = vcmp.eq.s32.totalorder %v344, %v481
    %vm490 = vcmp.eq.s32.totalorder %v345, %v481
    %vm491 = vcmp.eq.s32.totalorder %v346, %v481
    %vm492 = vcmp.eq.s32.totalorder %v347, %v481
    %vm493 = vcmp.eq.s32.totalorder %v348, %v481
    %vm494 = vcmp.eq.s32.totalorder %v349, %v481
    %vm495 = vcmp.eq.s32.totalorder %v350, %v481
    %vm496 = vcmp.eq.s32.totalorder %v351, %v481
    %vm497 = vcmp.eq.s32.totalorder %v352, %v481
    %v498 = vsel %vm482, %v406, 0.0
    %v499 = vsel %vm483, %v407, 0.0
    %v500 = vsel %vm484, %v408, 0.0
    %v501 = vsel %vm485, %v409, 0.0
    %v502 = vsel %vm486, %v410, 0.0
    %v503 = vsel %vm487, %v411, 0.0
    %v504 = vsel %vm488, %v412, 0.0
    %v505 = vsel %vm489, %v413, 0.0
    %v506 = vsel %vm490, %v414, 0.0
    %v507 = vsel %vm491, %v415, 0.0
    %v508 = vsel %vm492, %v416, 0.0
    %v509 = vsel %vm493, %v417, 0.0
    %v510 = vsel %vm494, %v418, 0.0
    %v511 = vsel %vm495, %v419, 0.0
    %v512 = vsel %vm496, %v420, 0.0
    %v513 = vsel %vm497, %v421, 0.0
    %v514 = vadd.f32 %v498, %v499
    %v515 = vadd.f32 %v514, %v500
    %v516 = vadd.f32 %v515, %v501
    %v517 = vadd.f32 %v516, %v502
    %v518 = vadd.f32 %v517, %v503
    %v519 = vadd.f32 %v518, %v504
    %v520 = vadd.f32 %v519, %v505
    %v521 = vadd.f32 %v520, %v506
    %v522 = vadd.f32 %v521, %v507
    %v523 = vadd.f32 %v522, %v508
    %v524 = vadd.f32 %v523, %v509
    %v525 = vadd.f32 %v524, %v510
    %v526 = vadd.f32 %v525, %v511
    %v527 = vadd.f32 %v526, %v512
    %v528 = vadd.f32 %v527, %v513
    %v529 = vrot.slane %v528, 4
    %v530 = vadd.f32 %v528, %v529
    %v531 = vrot.slane %v530, 2
    %v532 = vadd.f32 %v530, %v531
    %v533 = vrot.slane %v532, 1
    %v534 = vadd.f32 %v532, %v533
    %v535 = vsub.f32 %v476, %v534
    %536 = vst [vmem:[#allocation8] sm:$0x1] %v535
    %vm537 = vcmp.eq.f32.partialorder %v369, %v405
    %vm538 = vcmp.eq.f32.partialorder %v370, %v405
    %vm539 = vcmp.eq.f32.partialorder %v371, %v405
    %vm540 = vcmp.eq.f32.partialorder %v372, %v405
    %vm541 = vcmp.eq.f32.partialorder %v373, %v405
    %vm542 = vcmp.eq.f32.partialorder %v374, %v405
    %vm543 = vcmp.eq.f32.partialorder %v375, %v405
    %vm544 = vcmp.eq.f32.partialorder %v376, %v405
    %vm545 = vcmp.eq.f32.partialorder %v377, %v405
    %vm546 = vcmp.eq.f32.partialorder %v378, %v405
    %vm547 = vcmp.eq.f32.partialorder %v379, %v405
    %vm548 = vcmp.eq.f32.partialorder %v380, %v405
    %vm549 = vcmp.eq.f32.partialorder %v381, %v405
    %vm550 = vcmp.eq.f32.partialorder %v382, %v405
    %vm551 = vcmp.eq.f32.partialorder %v383, %v405
    %vm552 = vcmp.eq.f32.partialorder %v384, %v405
    %v553 = vsel %vm537, %v337, 128
    %v554 = vsel %vm538, %v338, 128
    %v555 = vsel %vm539, %v339, 128
    %v556 = vsel %vm540, %v340, 128
    %v557 = vsel %vm541, %v341, 128
    %v558 = vsel %vm542, %v342, 128
    %v559 = vsel %vm543, %v343, 128
    %v560 = vsel %vm544, %v344, 128
    %v561 = vsel %vm545, %v345, 128
    %v562 = vsel %vm546, %v346, 128
    %v563 = vsel %vm547, %v347, 128
    %v564 = vsel %vm548, %v348, 128
    %v565 = vsel %vm549, %v349, 128
    %v566 = vsel %vm550, %v350, 128
    %v567 = vsel %vm551, %v351, 128
    %v568 = vsel %vm552, %v352, 128
    %vm569 = vcmp.lt.s32.totalorder %v553, %v557
    %v570 = vsel %vm569, %v553, %v557
    %vm571 = vcmp.lt.s32.totalorder %v554, %v558
    %v572 = vsel %vm571, %v554, %v558
    %vm573 = vcmp.lt.s32.totalorder %v555, %v559
    %v574 = vsel %vm573, %v555, %v559
    %vm575 = vcmp.lt.s32.totalorder %v556, %v560
    %v576 = vsel %vm575, %v556, %v560
    %vm577 = vcmp.lt.s32.totalorder %v570, %v561
    %v578 = vsel %vm577, %v570, %v561
    %vm579 = vcmp.lt.s32.totalorder %v572, %v562
    %v580 = vsel %vm579, %v572, %v562
    %vm581 = vcmp.lt.s32.totalorder %v574, %v563
    %v582 = vsel %vm581, %v574, %v563
    %vm583 = vcmp.lt.s32.totalorder %v576, %v564
    %v584 = vsel %vm583, %v576, %v564
    %vm585 = vcmp.lt.s32.totalorder %v578, %v565
    %v586 = vsel %vm585, %v578, %v565
    %vm587 = vcmp.lt.s32.totalorder %v580, %v566
    %v588 = vsel %vm587, %v580, %v566
    %vm589 = vcmp.lt.s32.totalorder %v582, %v567
    %v590 = vsel %vm589, %v582, %v567
    %vm591 = vcmp.lt.s32.totalorder %v584, %v568
    %v592 = vsel %vm591, %v584, %v568
    %vm593 = vcmp.lt.s32.totalorder %v586, %v588
    %v594 = vsel %vm593, %v586, %v588
    %vm595 = vcmp.lt.s32.totalorder %v590, %v592
    %v596 = vsel %vm595, %v590, %v592
    %vm597 = vcmp.lt.s32.totalorder %v594, %v596
    %v598 = vsel %vm597, %v594, %v596
    %v599 = vrot.slane %v598, 4
    %vm600 = vcmp.lt.s32.totalorder %v598, %v599
    %v601 = vsel %vm600, %v598, %v599
    %v602 = vrot.slane %v601, 2
    %vm603 = vcmp.lt.s32.totalorder %v601, %v602
    %v604 = vsel %vm603, %v601, %v602
    %v605 = vrot.slane %v604, 1
    %vm606 = vcmp.lt.s32.totalorder %v604, %v605
    %v607 = vsel %vm606, %v604, %v605
    %vm608 = vcmp.eq.s32.totalorder %v607, %v477
    %v609 = vsel %vm608, 1, 0
    %v610 = vcvt.s32.f32 %v609
    %611 = vst [vmem:[#allocation9] sm:$0x1] %v610
    // Predicated region
    $region30: #{tpu_custom_call.1} parent=1 // pred_check
      _
    $region31: #{tpu_custom_call.1} parent=1 // pred_check_branch
      %613 = sbr.rel (0) target = $region33
    $region32: #{tpu_custom_call.1} parent=1 // pred_region
      %s615 = ssub.s32 16, 16
      %616 = vsyncadd [#allocation4], %s615
      %s618 = sshll.u32 [#allocation8], 4
      %s619 = int_to_ptr.vmem [resolvable:$true] %s618
      %621 = dma.vmem_to_hbm [thread:$0]  %s619, 16, %s4, [#allocation4]
    $region33: #{tpu_custom_call.1} parent=1 // pred_fallthru
      _
    // Predicated region
    $region34: #{tpu_custom_call.1} parent=1 // pred_check
      _
    $region35: #{tpu_custom_call.1} parent=1 // pred_check_branch
      %623 = sbr.rel (0) target = $region37
    $region36: #{tpu_custom_call.1} parent=1 // pred_region
      %s625 = ssub.s32 16, 16
      %626 = vsyncadd [#allocation10], %s625
      %s628 = sshll.u32 [#allocation9], 4
      %s629 = int_to_ptr.vmem [resolvable:$true] %s628
      %631 = dma.vmem_to_hbm [thread:$0]  %s629, 16, %s5, [#allocation10]
    $region37: #{tpu_custom_call.1} parent=1 // pred_fallthru
      _
    // Predicated region
    $region38: #{tpu_custom_call.1} parent=1 // pred_check
      _
    $region39: #{tpu_custom_call.1} parent=1 // pred_check_branch
      %633 = sbr.rel (0) target = $region41
    $region40: #{tpu_custom_call.1} parent=1 // pred_region
      %634 = dma.done [#allocation4], 16
    $region41: #{tpu_custom_call.1} parent=1 // pred_fallthru
      _
    // Predicated region
    $region42: #{tpu_custom_call.1} parent=1 // pred_check
      _
    $region43: #{tpu_custom_call.1} parent=1 // pred_check_branch
      %636 = sbr.rel (0) target = $region45
    $region44: #{tpu_custom_call.1} parent=1 // pred_region
      %637 = dma.done [#allocation10], 16
    $region45: #{tpu_custom_call.1} parent=1 // pred_fallthru
      _
    %638 = vsyncpa [#allocation3], 1
    %639 = vsyncpa [#allocation6], 1
    %640 = vsyncpa [#allocation4], 1
    %641 = vsyncpa [#allocation10], 1

</llo_original>
